<compile_context>
chip_gen: v7x
topology: tpu7x:2x2x1
jax: 0.10.0
libtpu: 0.0.40
codegen_flags: <defaults>
</compile_context>

<pallas_src>
import random

import jax
import jax.numpy as jnp
from jax.experimental import pallas as pl
from jax.experimental.pallas import tpu as pltpu


def _pos_emb_add_kernel(x_ref, emb_ref, o_ref):
    # x_ref  : (tB, tS, D) VMEM tile of the input
    # emb_ref: (tS, D)     VMEM tile of the pre-sliced embedding window
    # o_ref  : (tB, tS, D) VMEM output tile
    # Upcast to f32 for the add (matches PyTorch), cast only the stored result.
    emb = emb_ref[...].astype(jnp.float32)
    o_ref[...] = (x_ref[...].astype(jnp.float32) + emb[None, :, :]).astype(
        o_ref.dtype
    )


def _vmem_capacity_bytes():
    """Physical VMEM per TensorCore; conservative fallback if query fails."""
    try:
        return int(pltpu.get_tpu_info().vmem_capacity_bytes)
    except Exception:
        return 64 * 1024 * 1024  # v7x per-TC size (smallest of the targets)


def _choose_tiles(B, S, D, x_itemsize, emb_itemsize, budget_bytes):
    """Pick (tB, tS) so double-buffered pipeline buffers fit `budget_bytes`.

    tS steps in multiples of the sublane packing of x's dtype (8 rows for
    f32, 16 for bf16, 32 for int8/fp8) so stores stay sublane-dense; targets
    the ~512-row HBM-roofline knee.  Batch is tiled only when folding all of
    B would collapse tS below a single packed tile.
    """
    step = 8 * max(1, 4 // max(1, x_itemsize))

    def per_seq_row_bytes(tB):
        # double-buffered x tile + double-buffered out tile + double-buffered
        # embedding rows (f32/bf16 table), per sequence row.
        return 4 * tB * D * x_itemsize + 2 * D * emb_itemsize

    tB = B
    while tB > 1 and step * per_seq_row_bytes(tB) > budget_bytes:
        tB = max(1, tB // 2)

    max_rows = max(step, budget_bytes // per_seq_row_bytes(tB))
    target = min(S, 512, max_rows)
    if target >= S:
        tS = S  # full sequence in one block: no tail masking needed
    else:
        tS = max(step, (target // step) * step)
    return tB, tS


def learned_position_embeddings_fwd(x, emb_table, start):
    """x: (B, S, D); emb_table: (seq_len, D); start: host-side Python int."""
    B, S, D = x.shape
    seq_len, D2 = emb_table.shape
    assert D == D2 and S <= seq_len

    # Clamp host-side so the window [start, start+S) never runs off the table.
    # TODO(synk): if a traced `start` is ever needed (relative=True under jit),
    # switch back to scalar prefetch with jnp.clip instead of int().
    start = int(max(0, min(int(start), seq_len - S)))

    # Host-side window slice: the kernel only ever sees the S rows it needs,
    # auto-pipelined by the standard BlockSpec machinery.
    emb_window = jax.lax.slice_in_dim(emb_table, start, start + S, axis=0)

    vmem_capacity = _vmem_capacity_bytes()
    # Tile budget: bigger tiles on 128 MiB v5e/v6e, conservative on 64 MiB v7x.
    budget = min(vmem_capacity // 2, 56 * 1024 * 1024)
    tB, tS = _choose_tiles(
        B, S, D, x.dtype.itemsize, emb_window.dtype.itemsize, budget
    )

    # Batch innermost so the embedding tile (independent of b) stays resident.
    grid = (pl.cdiv(S, tS), pl.cdiv(B, tB))

    # Right-sized VMEM limit: actual double-buffered footprint + scratch room.
    footprint = (
        4 * tB * tS * D * x.dtype.itemsize
        + 2 * tS * D * emb_window.dtype.itemsize
    )
    vmem_limit = int(
        min(max(footprint + (8 << 20), 16 << 20), (vmem_capacity * 3) // 4)
    )

    return pl.pallas_call(
        _pos_emb_add_kernel,
        out_shape=jax.ShapeDtypeStruct((B, S, D), x.dtype),
        grid=grid,
        in_specs=[
            pl.BlockSpec((tB, tS, D), lambda s, b: (b, s, 0)),
            pl.BlockSpec((tS, D), lambda s, b: (s, 0)),
        ],
        out_specs=pl.BlockSpec((tB, tS, D), lambda s, b: (b, s, 0)),
        compiler_params=pltpu.CompilerParams(
            # No cross-step state -> both axes shard across v7x's 2 TCs.
            dimension_semantics=("parallel", "parallel"),
            vmem_limit_bytes=vmem_limit,
        ),
    )(x, emb_window)


class LearnedPositionEmbeddingsJAX:
    """Mirror of the PyTorch module; forward implemented with the Pallas kernel."""

    def __init__(self, seq_len, model_dim, init=0.02, relative=False, key=None):
        if key is None:
            key = jax.random.PRNGKey(0)
        # torch.nn.Embedding weight initialized N(0, init)
        self.emb_weight = (
            init * jax.random.normal(key, (seq_len, model_dim))
        ).astype(jnp.float32)
        self.seq_len = seq_len
        self.relative = relative

    def _get_start(self, sl):
        if self.relative:
            # same semantics as: random.randint(sl, self.seq_len) - sl
            return random.randint(sl, self.seq_len) - sl
        return 0

    def forward(self, x):
        sl = x.shape[1]
        start = self._get_start(sl)
        return learned_position_embeddings_fwd(x, self.emb_weight, start), start

    def get_fixed_embedding(self, ind):
        return self.emb_weight[ind][None, None, :]


if __name__ == "__main__":
    random.seed(0)  # deterministic "relative" start
    key = jax.random.PRNGKey(0)
    k_emb, k_x = jax.random.split(key)

    # D=128 keeps the output block lane-dense (unmasked stores).
    B, S, D = 2, 16, 128
    SEQ_LEN = 32

    x = jax.random.normal(k_x, (B, S, D), dtype=jnp.float32)

    # absolute positions (relative=False)
    mod_abs = LearnedPositionEmbeddingsJAX(
        SEQ_LEN, D, init=0.02, relative=False, key=k_emb
    )
    out_abs, start_abs = mod_abs.forward(x)
    out_abs = jax.block_until_ready(out_abs)
    ref_abs = x + mod_abs.emb_weight[start_abs:start_abs + S][None, :, :]
    assert jnp.allclose(out_abs, ref_abs, atol=1e-6), "absolute mode mismatch"

    # relative positions (relative=True) with deterministic python RNG
    mod_rel = LearnedPositionEmbeddingsJAX(
        SEQ_LEN, D, init=0.02, relative=True, key=k_emb
    )
    out_rel, start_rel = mod_rel.forward(x)
    out_rel = jax.block_until_ready(out_rel)
    ref_rel = x + mod_rel.emb_weight[start_rel:start_rel + S][None, :, :]
    assert jnp.allclose(out_rel, ref_rel, atol=1e-6), "relative mode mismatch"

    # bf16 input path (exercises the dtype-aware tile step + f32 upcast add)
    x_bf16 = x.astype(jnp.bfloat16)
    out_bf16, start_bf16 = mod_abs.forward(x_bf16)
    out_bf16 = jax.block_until_ready(out_bf16)
    ref_bf16 = (
        x_bf16.astype(jnp.float32)
        + mod_abs.emb_weight[start_bf16:start_bf16 + S][None, :, :]
    ).astype(jnp.bfloat16)
    assert jnp.allclose(
        out_bf16.astype(jnp.float32), ref_bf16.astype(jnp.float32), atol=1e-2
    ), "bf16 mode mismatch"

    print("KERNEL_OK")
</pallas_src>

<mosaic_0001>
module attributes {stable_mosaic.version = 11 : i64} {
  func.func @_pos_emb_add_kernel(%arg0: i32, %arg1: i32, %arg2: memref<2x16x128xf32, #tpu.memory_space<vmem>>, %arg3: memref<16x128xf32, #tpu.memory_space<vmem>>, %arg4: memref<2x16x128xf32, #tpu.memory_space<vmem>>) attributes {dimension_semantics = [#tpu.dimension_semantics<parallel>, #tpu.dimension_semantics<parallel>], iteration_bounds = array<i64: 1, 1>, scalar_prefetch = 0 : i64, scratch_operands = 0 : i64, tpu.core_type = #tpu.core_type<tc>, window_params = [{transform_indices = @transform_0, window_bounds = array<i64: 2, 16, 128>}, {transform_indices = @transform_1, window_bounds = array<i64: 16, 128>}, {transform_indices = @transform_2, window_bounds = array<i64: 2, 16, 128>}]} {
    %c0 = arith.constant 0 : index
    %c0_0 = arith.constant 0 : index
    %0 = vector.load %arg3[%c0, %c0_0] : memref<16x128xf32, #tpu.memory_space<vmem>>, vector<16x128xf32>
    %c0_1 = arith.constant 0 : index
    %c0_2 = arith.constant 0 : index
    %c0_3 = arith.constant 0 : index
    %1 = vector.load %arg2[%c0_1, %c0_2, %c0_3] : memref<2x16x128xf32, #tpu.memory_space<vmem>>, vector<2x16x128xf32>
    %2 = vector.shape_cast %0 : vector<16x128xf32> to vector<1x16x128xf32>
    %3 = vector.broadcast %2 : vector<1x16x128xf32> to vector<2x16x128xf32>
    %4 = arith.addf %1, %3 : vector<2x16x128xf32>
    %c0_4 = arith.constant 0 : index
    %c0_5 = arith.constant 0 : index
    %c0_6 = arith.constant 0 : index
    %5 = vector.load %arg4[%c0_4, %c0_5, %c0_6] : memref<2x16x128xf32, #tpu.memory_space<vmem>>, vector<2x16x128xf32>
    tpu.vector_store %arg4[%c0_4, %c0_5, %c0_6], %4 {strides = array<i32>} : memref<2x16x128xf32, #tpu.memory_space<vmem>>, vector<2x16x128xf32>,
    return
  }
  func.func @transform_0(%arg0: i32, %arg1: i32) -> (i32, i32, i32) {
    %c0_i32 = arith.constant 0 : i32
    %c0_i32_0 = arith.constant 0 : i32
    return %arg1, %arg0, %c0_i32 : i32, i32, i32
  }
  func.func @transform_1(%arg0: i32, %arg1: i32) -> (i32, i32) {
    %c0_i32 = arith.constant 0 : i32
    %c0_i32_0 = arith.constant 0 : i32
    return %arg0, %c0_i32 : i32, i32
  }
  func.func @transform_2(%arg0: i32, %arg1: i32) -> (i32, i32, i32) {
    %c0_i32 = arith.constant 0 : i32
    %c0_i32_0 = arith.constant 0 : i32
    return %arg1, %arg0, %c0_i32 : i32, i32, i32
  }
}

</mosaic_0001>

<llo_original>
// kernel: tpu_custom_call.1
$region0: #{tpu_custom_call.1}
  #allocation0 [shape = 'u32[]', space=smem, size = 0x4, offset = 0x4, fixed_abs, tag = 'smem constant byte address 0x4 - core index']
  #allocation1 [shape = 'u32[144,128]{1,0:T(1,128)}', space=vmem, size = 0x12000, scoped, tag = 'internal scratch']
  %s0 = inlined_call_operand.hbm [shape: f32[2,16,128], index: 0, kind: input, shape index: {}]
  %s1 = inlined_call_operand.hbm [shape: f32[16,128], index: 1, kind: input, shape index: {}]
  %s2 = inlined_call_operand.hbm [shape: f32[2,16,128], index: 2, kind: output, shape index: {}]
  %s3 = sld [smem:[#allocation0]]
  $region26: #{tpu_custom_call.1} parent=0
    _
  %s5 = ssub.s32 1, %s3
  %s6 = scalar_select 0, %s5, %s3
  $region1: #{tpu_custom_call.1} parent=0
    #allocation2 [shape = 'u8[16384]{0}', space=vmem, size = 0x4000, scoped, tag = 'input window, operand 0, single buffered']
    #allocation3 [shape = 's32[1]{0}', space=sflag, size = 0x4, scoped, tag = 'scoped memory for tpu_custom_call.1']
    #allocation4 [shape = 's32[1]{0}', space=sflag, size = 0x4, scoped, tag = 'scoped memory for tpu_custom_call.1']
    #allocation5 [shape = 'u8[8192]{0}', space=vmem, size = 0x2000, scoped, tag = 'input window, operand 1, single buffered']
    #allocation6 [shape = 's32[1]{0}', space=sflag, size = 0x4, scoped, tag = 'scoped memory for tpu_custom_call.1']
    #allocation7 [shape = 'u8[16384]{0}', space=vmem, size = 0x4000, scoped, tag = 'output window, operand 0, single buffered']
    %7 = vsyncpa [#allocation3], 0
    %8 = vsyncpa [#allocation6], 0
    %9 = vsyncpa [#allocation4], 0
    // Predicated region
    $region2: #{tpu_custom_call.1} parent=1 // pred_check
      _
    $region3: #{tpu_custom_call.1} parent=1 // pred_check_branch
      %11 = sbr.rel (0) target = $region5
    $region4: #{tpu_custom_call.1} parent=1 // pred_region
      %s13 = ssub.s32 512, 512
      %14 = vsyncadd [#allocation3], %s13
      %s15 = sshll.u32 [#allocation2], 4
      %s16 = int_to_ptr.vmem [resolvable:$true] %s15
      %21 = dma.hbm_to_vmem [thread:$0]  %s0, 512, %s16, [#allocation3], 128, 128, 8
    $region5: #{tpu_custom_call.1} parent=1 // pred_fallthru
      _
    // Predicated region
    $region6: #{tpu_custom_call.1} parent=1 // pred_check
      _
    $region7: #{tpu_custom_call.1} parent=1 // pred_check_branch
      %23 = sbr.rel (0) target = $region9
    $region8: #{tpu_custom_call.1} parent=1 // pred_region
      %s25 = ssub.s32 256, 256
      %26 = vsyncadd [#allocation6], %s25
      %s27 = sshll.u32 [#allocation5], 4
      %s28 = int_to_ptr.vmem [resolvable:$true] %s27
      %33 = dma.hbm_to_vmem [thread:$0]  %s1, 256, %s28, [#allocation6], 128, 128, 8
    $region9: #{tpu_custom_call.1} parent=1 // pred_fallthru
      _
    // Predicated region
    $region10: #{tpu_custom_call.1} parent=1 // pred_check
      _
    $region11: #{tpu_custom_call.1} parent=1 // pred_check_branch
      %35 = sbr.rel (0) target = $region13
    $region12: #{tpu_custom_call.1} parent=1 // pred_region
      %36 = dma.done [#allocation3], 512
    $region13: #{tpu_custom_call.1} parent=1 // pred_fallthru
      _
    // Predicated region
    $region14: #{tpu_custom_call.1} parent=1 // pred_check
      _
    $region15: #{tpu_custom_call.1} parent=1 // pred_check_branch
      %38 = sbr.rel (0) target = $region17
    $region16: #{tpu_custom_call.1} parent=1 // pred_region
      %39 = dma.done [#allocation6], 256
    $region17: #{tpu_custom_call.1} parent=1 // pred_fallthru
      _
    %v40 = vld [vmem:[#allocation5] sm:$0xff]
    %v41 = vld [vmem:[#allocation5 + $0x8] sm:$0xff]
    %v42 = vld [vmem:[#allocation2] sm:$0xff]
    %v43 = vld [vmem:[#allocation2 + $0x8] sm:$0xff]
    %v44 = vld [vmem:[#allocation2 + $0x10] sm:$0xff]
    %v45 = vld [vmem:[#allocation2 + $0x18] sm:$0xff]
    %v46 = vadd.f32 %v42, %v40
    %v47 = vadd.f32 %v43, %v41
    %v48 = vadd.f32 %v44, %v40
    %v49 = vadd.f32 %v45, %v41
    %50 = vst [vmem:[#allocation7] sm:$0xff] %v46
    %51 = vst [vmem:[#allocation7 + $0x8] sm:$0xff] %v47
    %52 = vst [vmem:[#allocation7 + $0x10] sm:$0xff] %v48
    %53 = vst [vmem:[#allocation7 + $0x18] sm:$0xff] %v49
    // Predicated region
    $region18: #{tpu_custom_call.1} parent=1 // pred_check
      _
    $region19: #{tpu_custom_call.1} parent=1 // pred_check_branch
      %55 = sbr.rel (0) target = $region21
    $region20: #{tpu_custom_call.1} parent=1 // pred_region
      %s57 = ssub.s32 512, 512
      %58 = vsyncadd [#allocation4], %s57
      %s59 = sshll.u32 [#allocation7], 4
      %s60 = int_to_ptr.vmem [resolvable:$true] %s59
      %65 = dma.vmem_to_hbm [thread:$0]  %s60, 512, %s2, [#allocation4], 128, 128, 8
    $region21: #{tpu_custom_call.1} parent=1 // pred_fallthru
      _
    // Predicated region
    $region22: #{tpu_custom_call.1} parent=1 // pred_check
      _
    $region23: #{tpu_custom_call.1} parent=1 // pred_check_branch
      %67 = sbr.rel (0) target = $region25
    $region24: #{tpu_custom_call.1} parent=1 // pred_region
      %68 = dma.done [#allocation4], 512
    $region25: #{tpu_custom_call.1} parent=1 // pred_fallthru
      _
    %69 = vsyncpa [#allocation3], 1
    %70 = vsyncpa [#allocation6], 1
    %71 = vsyncpa [#allocation4], 1

</llo_original>
